<compile_context>
chip_gen: v5e
topology: v5e:2x2
jax: 0.10.0
libtpu: 0.0.40
codegen_flags: <defaults>
</compile_context>

<pallas_src>
import math

import jax
import jax.numpy as jnp
from jax.experimental import pallas as pl
from jax.experimental.pallas import tpu as pltpu


# ---------------------------------------------------------------------------
# Pallas kernel
# ---------------------------------------------------------------------------
def flow_attention_kernel(x_ref, qw_ref, qb_ref, kw_ref, kb_ref, vw_ref, vb_ref,
                          pw_ref, pb_ref, mask_ref, out_ref):
    """Flow attention for one (Bt, N, C) batch tile.

    mask_ref is a (C, C) block-diagonal mask: mask[c, c'] == 1 iff channels
    c and c' belong to the same attention head.
    """
    Bt, N, C = x_ref.shape
    rows = Bt * N
    eps = 1e-6
    f32 = jnp.float32

    x2 = x_ref[...].reshape(rows, C)                # fold batch+tokens into matmul rows

    # q / k / v projections: (rows, C) @ (C, C) full-width MXU matmuls.
    q2 = jax.nn.sigmoid(jnp.dot(x2, qw_ref[...], preferred_element_type=f32) + qb_ref[...])
    k2 = jax.nn.sigmoid(jnp.dot(x2, kw_ref[...], preferred_element_type=f32) + kb_ref[...])
    v2 = jnp.dot(x2, vw_ref[...], preferred_element_type=f32) + vb_ref[...]

    mask = mask_ref[...]                            # (C, C) same-head mask

    def head_sum(a3):
        # Per-head sum over channels, broadcast back over each head's channels.
        # One lane-dense (rows, C) @ (C, C) matmul instead of H sub-lane slices.
        return jnp.dot(a3.reshape(rows, C), mask,
                       preferred_element_type=f32).reshape(Bt, N, C)

    q3 = q2.reshape(Bt, N, C)
    k3 = k2.reshape(Bt, N, C)
    v3 = v2.reshape(Bt, N, C)
    qe = q3 + eps                                   # hoisted, reused twice
    ke = k3 + eps

    k_tok = jnp.sum(k3, axis=1, keepdims=True)      # (Bt, 1, C) sum over tokens
    q_tok = jnp.sum(q3, axis=1, keepdims=True)

    sink_incoming = 1.0 / (head_sum(qe * (k_tok + eps)) + eps)      # (Bt, N, C)
    source_outgoing = 1.0 / (head_sum(ke * (q_tok + eps)) + eps)    # (Bt, N, C)

    conserved_sink = head_sum(
        qe * (jnp.sum(k3 * source_outgoing, axis=1, keepdims=True) + eps)) + eps
    conserved_source = head_sum(
        ke * (jnp.sum(q3 * sink_incoming, axis=1, keepdims=True) + eps)) + eps
    conserved_source = jnp.clip(conserved_source, -1.0, 1.0)

    # torch: sigmoid(conserved_sink * (len_q / len_k)); len_q == len_k -> scale 1.
    sink_allocation = jax.nn.sigmoid(conserved_sink)

    # torch: softmax over the token axis (dim=-1 of (B, H, N)), scaled by N.
    cs_max = jnp.max(conserved_source, axis=1, keepdims=True)
    ex = jnp.exp(conserved_source - cs_max)
    source_competition = ex / jnp.sum(ex, axis=1, keepdims=True) * float(N)

    # kv = k^T @ (v * competition) for all heads at once: full (C, C) product
    # per batch element, masked to its block diagonal, then one (N, C) @ (C, C)
    # matmul replaces H tiny (N, D) @ (D, D) matmuls.
    vs3 = v3 * source_competition                   # (Bt, N, C)
    kT = jnp.swapaxes(k3, 1, 2)                     # (Bt, C, N)
    kv = jnp.einsum('bcn,bne->bce', kT, vs3,
                    preferred_element_type=f32)     # (Bt, C, C)
    kv = kv * mask[None, :, :]                      # keep same-head blocks only
    upd = jnp.einsum('bnc,bce->bne', q3, kv,
                     preferred_element_type=f32)    # (Bt, N, C)
    upd = upd * sink_incoming * sink_allocation

    out2 = jnp.dot(upd.reshape(rows, C), pw_ref[...],
                   preferred_element_type=f32) + pb_ref[...]
    out_ref[...] = out2.reshape(Bt, N, C)


# ---------------------------------------------------------------------------
# Wrapper
# ---------------------------------------------------------------------------
def _pick_block_batch(B, N, C, target_rows=512, kv_budget_bytes=8 * 2**20):
    """Largest divisor of B keeping ~target_rows matmul rows per grid step and
    a bounded (Bt, C, C) kv intermediate in VMEM."""
    bt = 1
    for cand in range(1, B + 1):
        if B % cand:
            continue
        if cand * N > max(target_rows, N):
            break
        if cand > 1 and cand * C * C * 4 > kv_budget_bytes:
            break
        bt = cand
    return bt


def flow_attention(x, params, num_heads=8, block_batch=None):
    B, N, C = x.shape
    assert C % num_heads == 0
    D = C // num_heads

    if block_batch is None:
        block_batch = _pick_block_batch(B, N, C)
    assert B % block_batch == 0, "block_batch must divide the batch size"
    grid = (B // block_batch,)

    # Split the fused qkv weight (pre-transposed to (C, 3C)) into three (C, C)
    # matrices so q/k/v never require lane slicing inside the kernel.
    qkv_w, qkv_b = params['qkv_w'], params['qkv_b']
    q_w, k_w, v_w = qkv_w[:, :C], qkv_w[:, C:2 * C], qkv_w[:, 2 * C:]
    q_b = qkv_b[:C].reshape(1, C)
    k_b = qkv_b[C:2 * C].reshape(1, C)
    v_b = qkv_b[2 * C:].reshape(1, C)
    p_w = params['proj_w']
    p_b = params['proj_b'].reshape(1, C)

    # Block-diagonal "same head" mask (channels c, c' in the same head).
    cid = jnp.arange(C, dtype=jnp.int32) // D
    head_mask = (cid[:, None] == cid[None, :]).astype(jnp.float32)

    weights = [q_w, q_b, k_w, k_b, v_w, v_b, p_w, p_b, head_mask]

    x_spec = pl.BlockSpec((block_batch, N, C), lambda b: (b, 0, 0))
    # Constant index maps: weights are fetched once and stay resident in VMEM.
    # TODO(synk): single-buffer weights (pl.Buffered(1)) / bf16 matmul inputs to
    # halve weight VMEM on v7x once fully supported; kept default + f32 here
    # for portability and exact reference semantics.
    w_specs = [pl.BlockSpec(w.shape, lambda b: (0, 0)) for w in weights]

    # Explicit VMEM budget: double-buffered activation blocks + resident
    # weights + in-kernel intermediates (q/k/v, reductions, kv).
    act_bytes = block_batch * N * C * 4
    w_bytes = sum(int(w.size) * 4 for w in weights)
    interm_bytes = (14 * block_batch * N * C + 2 * block_batch * C * C) * 4
    vmem_limit = int(min(64 * 2**20,
                         max(32 * 2**20,
                             4 * act_bytes + 2 * w_bytes + interm_bytes)))

    # Rough cost hint for the XLA scheduler around the custom call.
    flops = 20 * B * N * C * C              # qkv + proj + head-sum + kv + q@kv matmuls
    transcendentals = 4 * B * N * C         # sigmoids on q/k, sink sigmoid, softmax exp
    bytes_accessed = 4 * (2 * B * N * C + sum(int(w.size) for w in weights))
    cost = pl.CostEstimate(flops=flops, transcendentals=transcendentals,
                           bytes_accessed=bytes_accessed)

    return pl.pallas_call(
        flow_attention_kernel,
        out_shape=jax.ShapeDtypeStruct((B, N, C), jnp.float32),
        grid=grid,
        in_specs=[x_spec] + w_specs,
        out_specs=x_spec,
        compiler_params=pltpu.CompilerParams(
            dimension_semantics=("parallel",),
            vmem_limit_bytes=vmem_limit),
        cost_estimate=cost,
    )(x, *weights)


# ---------------------------------------------------------------------------
# Pure-JAX reference (mirror of the PyTorch Flow_Attention forward)
# ---------------------------------------------------------------------------
def flow_attention_ref(x, params, num_heads):
    B, N, C = x.shape
    D = C // num_heads
    eps = 1e-6
    qkv = x @ params['qkv_w'] + params['qkv_b']
    qkv = qkv.reshape(B, N, 3, num_heads, D).transpose(2, 0, 3, 1, 4)
    q, k, v = qkv[0], qkv[1], qkv[2]                       # (B, H, N, D)
    q, k = jax.nn.sigmoid(q), jax.nn.sigmoid(k)

    def my_sum(a, b):
        return jnp.sum(a * b[:, :, None, :], axis=-1)

    sink_incoming = 1.0 / (my_sum(q + eps, k.sum(axis=2) + eps) + eps)
    source_outgoing = 1.0 / (my_sum(k + eps, q.sum(axis=2) + eps) + eps)
    conserved_sink = my_sum(q + eps, (k * source_outgoing[..., None]).sum(axis=2) + eps) + eps
    conserved_source = my_sum(k + eps, (q * sink_incoming[..., None]).sum(axis=2) + eps) + eps
    conserved_source = jnp.clip(conserved_source, -1.0, 1.0)
    sink_allocation = jax.nn.sigmoid(conserved_sink * (float(q.shape[2]) / float(k.shape[2])))
    source_competition = jax.nn.softmax(conserved_source, axis=-1) * float(k.shape[2])
    kv = jnp.swapaxes(k, -2, -1) @ (v * source_competition[..., None])
    x_update = (q @ kv) * sink_incoming[..., None] * sink_allocation[..., None]
    out = jnp.swapaxes(x_update, 1, 2).reshape(B, N, C)
    return out @ params['proj_w'] + params['proj_b']


def init_params(key, dim):
    """PyTorch nn.Linear-style init; weights pre-transposed to (in, out)."""
    def linear(k, fan_in, fan_out):
        bound = 1.0 / math.sqrt(fan_in)
        kw, kb = jax.random.split(k)
        W = jax.random.uniform(kw, (fan_in, fan_out), jnp.float32, -bound, bound)
        b = jax.random.uniform(kb, (fan_out,), jnp.float32, -bound, bound)
        return W, b

    k1, k2 = jax.random.split(key)
    qkv_w, qkv_b = linear(k1, dim, 3 * dim)
    proj_w, proj_b = linear(k2, dim, dim)
    return dict(qkv_w=qkv_w, qkv_b=qkv_b, proj_w=proj_w, proj_b=proj_b)


if __name__ == "__main__":
    B, N, C, H = 2, 8, 32, 8          # num_heads=8 -> head_dim 4
    key = jax.random.PRNGKey(0)
    kx, kp = jax.random.split(key)
    x = jax.random.normal(kx, (B, N, C), jnp.float32)
    params = init_params(kp, C)

    out = flow_attention(x, params, num_heads=H)
    jax.block_until_ready(out)
    assert out.shape == (B, N, C)

    ref = flow_attention_ref(x, params, num_heads=H)
    err = float(jnp.max(jnp.abs(out - ref)))
    assert err < 2e-2, f"kernel mismatch vs reference: max abs err = {err}"
    print("KERNEL_OK")
</pallas_src>

<mosaic_0001>
module attributes {stable_mosaic.version = 11 : i64} {
  func.func @flow_attention_kernel(%arg0: i32, %arg1: memref<2x8x32xf32, #tpu.memory_space<vmem>>, %arg2: memref<32x32xf32, #tpu.memory_space<vmem>>, %arg3: memref<1x32xf32, #tpu.memory_space<vmem>>, %arg4: memref<32x32xf32, #tpu.memory_space<vmem>>, %arg5: memref<1x32xf32, #tpu.memory_space<vmem>>, %arg6: memref<32x32xf32, #tpu.memory_space<vmem>>, %arg7: memref<1x32xf32, #tpu.memory_space<vmem>>, %arg8: memref<32x32xf32, #tpu.memory_space<vmem>>, %arg9: memref<1x32xf32, #tpu.memory_space<vmem>>, %arg10: memref<32x32xf32, #tpu.memory_space<vmem>>, %arg11: memref<2x8x32xf32, #tpu.memory_space<vmem>>) attributes {dimension_semantics = [#tpu.dimension_semantics<parallel>], iteration_bounds = array<i64: 1>, scalar_prefetch = 0 : i64, scratch_operands = 0 : i64, tpu.core_type = #tpu.core_type<tc>, window_params = [{transform_indices = @transform_0, window_bounds = array<i64: 2, 8, 32>}, {pipeline_mode = #tpu.pipeline_mode<synchronous>, transform_indices = @transform_1, window_bounds = array<i64: 32, 32>}, {pipeline_mode = #tpu.pipeline_mode<synchronous>, transform_indices = @transform_2, window_bounds = array<i64: 1, 32>}, {pipeline_mode = #tpu.pipeline_mode<synchronous>, transform_indices = @transform_3, window_bounds = array<i64: 32, 32>}, {pipeline_mode = #tpu.pipeline_mode<synchronous>, transform_indices = @transform_4, window_bounds = array<i64: 1, 32>}, {pipeline_mode = #tpu.pipeline_mode<synchronous>, transform_indices = @transform_5, window_bounds = array<i64: 32, 32>}, {pipeline_mode = #tpu.pipeline_mode<synchronous>, transform_indices = @transform_6, window_bounds = array<i64: 1, 32>}, {pipeline_mode = #tpu.pipeline_mode<synchronous>, transform_indices = @transform_7, window_bounds = array<i64: 32, 32>}, {pipeline_mode = #tpu.pipeline_mode<synchronous>, transform_indices = @transform_8, window_bounds = array<i64: 1, 32>}, {pipeline_mode = #tpu.pipeline_mode<synchronous>, transform_indices = @transform_9, window_bounds = array<i64: 32, 32>}, {transform_indices = @transform_10, window_bounds = array<i64: 2, 8, 32>}]} {
    %c0 = arith.constant 0 : index
    %c0_0 = arith.constant 0 : index
    %c0_1 = arith.constant 0 : index
    %0 = vector.load %arg1[%c0, %c0_0, %c0_1] : memref<2x8x32xf32, #tpu.memory_space<vmem>>, vector<2x8x32xf32>
    %1 = vector.shape_cast %0 : vector<2x8x32xf32> to vector<16x32xf32>
    %c0_2 = arith.constant 0 : index
    %c0_3 = arith.constant 0 : index
    %2 = vector.load %arg2[%c0_2, %c0_3] : memref<32x32xf32, #tpu.memory_space<vmem>>, vector<32x32xf32>
    %cst = arith.constant dense<0.000000e+00> : vector<16x32xf32>
    %3 = tpu.matmul %1, %2, %cst {dimension_numbers = #tpu.dot_dimension_numbers<[1], [0], [0], [1], [0, 0, 1, 1], [], []>} : vector<16x32xf32>, vector<32x32xf32>, vector<16x32xf32> -> vector<16x32xf32>
    %c0_4 = arith.constant 0 : index
    %c0_5 = arith.constant 0 : index
    %4 = vector.load %arg3[%c0_4, %c0_5] : memref<1x32xf32, #tpu.memory_space<vmem>>, vector<1x32xf32>
    %5 = vector.broadcast %4 : vector<1x32xf32> to vector<16x32xf32>
    %6 = arith.addf %3, %5 : vector<16x32xf32>
    %7 = arith.negf %6 : vector<16x32xf32>
    %8 = math.exp %7 : vector<16x32xf32>
    %cst_6 = arith.constant 1.000000e+00 : f32
    %9 = vector.broadcast %cst_6 : f32 to vector<16x32xf32>
    %10 = arith.addf %9, %8 : vector<16x32xf32>
    %11 = arith.divf %9, %10 : vector<16x32xf32>
    %c0_7 = arith.constant 0 : index
    %c0_8 = arith.constant 0 : index
    %12 = vector.load %arg4[%c0_7, %c0_8] : memref<32x32xf32, #tpu.memory_space<vmem>>, vector<32x32xf32>
    %cst_9 = arith.constant dense<0.000000e+00> : vector<16x32xf32>
    %13 = tpu.matmul %1, %12, %cst_9 {dimension_numbers = #tpu.dot_dimension_numbers<[1], [0], [0], [1], [0, 0, 1, 1], [], []>} : vector<16x32xf32>, vector<32x32xf32>, vector<16x32xf32> -> vector<16x32xf32>
    %c0_10 = arith.constant 0 : index
    %c0_11 = arith.constant 0 : index
    %14 = vector.load %arg5[%c0_10, %c0_11] : memref<1x32xf32, #tpu.memory_space<vmem>>, vector<1x32xf32>
    %15 = vector.broadcast %14 : vector<1x32xf32> to vector<16x32xf32>
    %16 = arith.addf %13, %15 : vector<16x32xf32>
    %17 = arith.negf %16 : vector<16x32xf32>
    %18 = math.exp %17 : vector<16x32xf32>
    %cst_12 = arith.constant 1.000000e+00 : f32
    %19 = vector.broadcast %cst_12 : f32 to vector<16x32xf32>
    %20 = arith.addf %19, %18 : vector<16x32xf32>
    %21 = arith.divf %19, %20 : vector<16x32xf32>
    %c0_13 = arith.constant 0 : index
    %c0_14 = arith.constant 0 : index
    %22 = vector.load %arg6[%c0_13, %c0_14] : memref<32x32xf32, #tpu.memory_space<vmem>>, vector<32x32xf32>
    %cst_15 = arith.constant dense<0.000000e+00> : vector<16x32xf32>
    %23 = tpu.matmul %1, %22, %cst_15 {dimension_numbers = #tpu.dot_dimension_numbers<[1], [0], [0], [1], [0, 0, 1, 1], [], []>} : vector<16x32xf32>, vector<32x32xf32>, vector<16x32xf32> -> vector<16x32xf32>
    %c0_16 = arith.constant 0 : index
    %c0_17 = arith.constant 0 : index
    %24 = vector.load %arg7[%c0_16, %c0_17] : memref<1x32xf32, #tpu.memory_space<vmem>>, vector<1x32xf32>
    %25 = vector.broadcast %24 : vector<1x32xf32> to vector<16x32xf32>
    %26 = arith.addf %23, %25 : vector<16x32xf32>
    %c0_18 = arith.constant 0 : index
    %c0_19 = arith.constant 0 : index
    %27 = vector.load %arg10[%c0_18, %c0_19] : memref<32x32xf32, #tpu.memory_space<vmem>>, vector<32x32xf32>
    %28 = vector.shape_cast %11 : vector<16x32xf32> to vector<2x8x32xf32>
    %29 = vector.shape_cast %21 : vector<16x32xf32> to vector<2x8x32xf32>
    %30 = vector.shape_cast %26 : vector<16x32xf32> to vector<2x8x32xf32>
    %cst_20 = arith.constant 9.99999997E-7 : f32
    %31 = vector.broadcast %cst_20 : f32 to vector<2x8x32xf32>
    %32 = arith.addf %28, %31 : vector<2x8x32xf32>
    %cst_21 = arith.constant 9.99999997E-7 : f32
    %33 = vector.broadcast %cst_21 : f32 to vector<2x8x32xf32>
    %34 = arith.addf %29, %33 : vector<2x8x32xf32>
    %cst_22 = arith.constant dense<0.000000e+00> : vector<2x32xf32>
    %35 = vector.multi_reduction <add>, %29, %cst_22 [1] : vector<2x8x32xf32> to vector<2x32xf32>
    %36 = vector.shape_cast %35 : vector<2x32xf32> to vector<2x1x32xf32>
    %cst_23 = arith.constant dense<0.000000e+00> : vector<2x32xf32>
    %37 = vector.multi_reduction <add>, %28, %cst_23 [1] : vector<2x8x32xf32> to vector<2x32xf32>
    %38 = vector.shape_cast %37 : vector<2x32xf32> to vector<2x1x32xf32>
    %cst_24 = arith.constant 9.99999997E-7 : f32
    %39 = vector.broadcast %cst_24 : f32 to vector<2x1x32xf32>
    %40 = arith.addf %36, %39 : vector<2x1x32xf32>
    %41 = vector.broadcast %40 : vector<2x1x32xf32> to vector<2x8x32xf32>
    %42 = arith.mulf %32, %41 : vector<2x8x32xf32>
    %43 = vector.shape_cast %42 : vector<2x8x32xf32> to vector<16x32xf32>
    %cst_25 = arith.constant dense<0.000000e+00> : vector<16x32xf32>
    %44 = tpu.matmul %43, %27, %cst_25 {dimension_numbers = #tpu.dot_dimension_numbers<[1], [0], [0], [1], [0, 0, 1, 1], [], []>} : vector<16x32xf32>, vector<32x32xf32>, vector<16x32xf32> -> vector<16x32xf32>
    %45 = vector.shape_cast %44 : vector<16x32xf32> to vector<2x8x32xf32>
    %cst_26 = arith.constant 9.99999997E-7 : f32
    %46 = vector.broadcast %cst_26 : f32 to vector<2x8x32xf32>
    %47 = arith.addf %45, %46 : vector<2x8x32xf32>
    %cst_27 = arith.constant 1.000000e+00 : f32
    %48 = vector.broadcast %cst_27 : f32 to vector<2x8x32xf32>
    %49 = arith.divf %48, %47 : vector<2x8x32xf32>
    %cst_28 = arith.constant 9.99999997E-7 : f32
    %50 = vector.broadcast %cst_28 : f32 to vector<2x1x32xf32>
    %51 = arith.addf %38, %50 : vector<2x1x32xf32>
    %52 = vector.broadcast %51 : vector<2x1x32xf32> to vector<2x8x32xf32>
    %53 = arith.mulf %34, %52 : vector<2x8x32xf32>
    %54 = vector.shape_cast %53 : vector<2x8x32xf32> to vector<16x32xf32>
    %cst_29 = arith.constant dense<0.000000e+00> : vector<16x32xf32>
    %55 = tpu.matmul %54, %27, %cst_29 {dimension_numbers = #tpu.dot_dimension_numbers<[1], [0], [0], [1], [0, 0, 1, 1], [], []>} : vector<16x32xf32>, vector<32x32xf32>, vector<16x32xf32> -> vector<16x32xf32>
    %56 = vector.shape_cast %55 : vector<16x32xf32> to vector<2x8x32xf32>
    %cst_30 = arith.constant 9.99999997E-7 : f32
    %57 = vector.broadcast %cst_30 : f32 to vector<2x8x32xf32>
    %58 = arith.addf %56, %57 : vector<2x8x32xf32>
    %cst_31 = arith.constant 1.000000e+00 : f32
    %59 = vector.broadcast %cst_31 : f32 to vector<2x8x32xf32>
    %60 = arith.divf %59, %58 : vector<2x8x32xf32>
    %61 = arith.mulf %29, %60 : vector<2x8x32xf32>
    %cst_32 = arith.constant dense<0.000000e+00> : vector<2x32xf32>
    %62 = vector.multi_reduction <add>, %61, %cst_32 [1] : vector<2x8x32xf32> to vector<2x32xf32>
    %63 = vector.shape_cast %62 : vector<2x32xf32> to vector<2x1x32xf32>
    %cst_33 = arith.constant 9.99999997E-7 : f32
    %64 = vector.broadcast %cst_33 : f32 to vector<2x1x32xf32>
    %65 = arith.addf %63, %64 : vector<2x1x32xf32>
    %66 = vector.broadcast %65 : vector<2x1x32xf32> to vector<2x8x32xf32>
    %67 = arith.mulf %32, %66 : vector<2x8x32xf32>
    %68 = vector.shape_cast %67 : vector<2x8x32xf32> to vector<16x32xf32>
    %cst_34 = arith.constant dense<0.000000e+00> : vector<16x32xf32>
    %69 = tpu.matmul %68, %27, %cst_34 {dimension_numbers = #tpu.dot_dimension_numbers<[1], [0], [0], [1], [0, 0, 1, 1], [], []>} : vector<16x32xf32>, vector<32x32xf32>, vector<16x32xf32> -> vector<16x32xf32>
    %70 = vector.shape_cast %69 : vector<16x32xf32> to vector<2x8x32xf32>
    %cst_35 = arith.constant 9.99999997E-7 : f32
    %71 = vector.broadcast %cst_35 : f32 to vector<2x8x32xf32>
    %72 = arith.addf %70, %71 : vector<2x8x32xf32>
    %73 = arith.mulf %28, %49 : vector<2x8x32xf32>
    %cst_36 = arith.constant dense<0.000000e+00> : vector<2x32xf32>
    %74 = vector.multi_reduction <add>, %73, %cst_36 [1] : vector<2x8x32xf32> to vector<2x32xf32>
    %75 = vector.shape_cast %74 : vector<2x32xf32> to vector<2x1x32xf32>
    %cst_37 = arith.constant 9.99999997E-7 : f32
    %76 = vector.broadcast %cst_37 : f32 to vector<2x1x32xf32>
    %77 = arith.addf %75, %76 : vector<2x1x32xf32>
    %78 = vector.broadcast %77 : vector<2x1x32xf32> to vector<2x8x32xf32>
    %79 = arith.mulf %34, %78 : vector<2x8x32xf32>
    %80 = vector.shape_cast %79 : vector<2x8x32xf32> to vector<16x32xf32>
    %cst_38 = arith.constant dense<0.000000e+00> : vector<16x32xf32>
    %81 = tpu.matmul %80, %27, %cst_38 {dimension_numbers = #tpu.dot_dimension_numbers<[1], [0], [0], [1], [0, 0, 1, 1], [], []>} : vector<16x32xf32>, vector<32x32xf32>, vector<16x32xf32> -> vector<16x32xf32>
    %82 = vector.shape_cast %81 : vector<16x32xf32> to vector<2x8x32xf32>
    %cst_39 = arith.constant 9.99999997E-7 : f32
    %83 = vector.broadcast %cst_39 : f32 to vector<2x8x32xf32>
    %84 = arith.addf %82, %83 : vector<2x8x32xf32>
    %cst_40 = arith.constant -1.000000e+00 : f32
    %cst_41 = arith.constant 1.000000e+00 : f32
    %85 = vector.broadcast %cst_40 : f32 to vector<2x8x32xf32>
    %86 = arith.maximumf %85, %84 : vector<2x8x32xf32>
    %87 = vector.broadcast %cst_41 : f32 to vector<2x8x32xf32>
    %88 = arith.minimumf %87, %86 : vector<2x8x32xf32>
    %89 = arith.negf %72 : vector<2x8x32xf32>
    %90 = math.exp %89 : vector<2x8x32xf32>
    %cst_42 = arith.constant 1.000000e+00 : f32
    %91 = vector.broadcast %cst_42 : f32 to vector<2x8x32xf32>
    %92 = arith.addf %91, %90 : vector<2x8x32xf32>
    %93 = arith.divf %91, %92 : vector<2x8x32xf32>
    %cst_43 = arith.constant dense<0xFF800000> : vector<2x32xf32>
    %94 = vector.multi_reduction <maximumf>, %88, %cst_43 [1] : vector<2x8x32xf32> to vector<2x32xf32>
    %95 = vector.shape_cast %94 : vector<2x32xf32> to vector<2x1x32xf32>
    %96 = vector.broadcast %95 : vector<2x1x32xf32> to vector<2x8x32xf32>
    %97 = arith.subf %88, %96 : vector<2x8x32xf32>
    %98 = math.exp %97 : vector<2x8x32xf32>
    %cst_44 = arith.constant dense<0.000000e+00> : vector<2x32xf32>
    %99 = vector.multi_reduction <add>, %98, %cst_44 [1] : vector<2x8x32xf32> to vector<2x32xf32>
    %100 = vector.shape_cast %99 : vector<2x32xf32> to vector<2x1x32xf32>
    %101 = vector.broadcast %100 : vector<2x1x32xf32> to vector<2x8x32xf32>
    %102 = arith.divf %98, %101 : vector<2x8x32xf32>
    %cst_45 = arith.constant 8.000000e+00 : f32
    %103 = vector.broadcast %cst_45 : f32 to vector<2x8x32xf32>
    %104 = arith.mulf %102, %103 : vector<2x8x32xf32>
    %105 = arith.mulf %30, %104 : vector<2x8x32xf32>
    %106 = tpu.transpose %29, [0, 2, 1] : vector<2x8x32xf32> -> vector<2x32x8xf32>
    "tpu.trace_start"() <{level = 10 : i32, message = "bcn,bne->bce"}> : () -> ()
    %cst_46 = arith.constant dense<0.000000e+00> : vector<2x32x32xf32>
    %107 = tpu.matmul %106, %105, %cst_46 {dimension_numbers = #tpu.dot_dimension_numbers<[2], [1], [1], [2], [0, 0, 0, 1, 1, 2], [0], [0]>} : vector<2x32x8xf32>, vector<2x8x32xf32>, vector<2x32x32xf32> -> vector<2x32x32xf32>
    "tpu.trace_stop"() : () -> ()
    %108 = vector.shape_cast %27 : vector<32x32xf32> to vector<1x32x32xf32>
    %109 = vector.broadcast %108 : vector<1x32x32xf32> to vector<2x32x32xf32>
    %110 = arith.mulf %107, %109 : vector<2x32x32xf32>
    "tpu.trace_start"() <{level = 10 : i32, message = "bnc,bce->bne"}> : () -> ()
    %cst_47 = arith.constant dense<0.000000e+00> : vector<2x8x32xf32>
    %111 = tpu.matmul %28, %110, %cst_47 {dimension_numbers = #tpu.dot_dimension_numbers<[2], [1], [1], [2], [0, 0, 0, 1, 1, 2], [0], [0]>} : vector<2x8x32xf32>, vector<2x32x32xf32>, vector<2x8x32xf32> -> vector<2x8x32xf32>
    "tpu.trace_stop"() : () -> ()
    %112 = arith.mulf %111, %49 : vector<2x8x32xf32>
    %113 = arith.mulf %112, %93 : vector<2x8x32xf32>
    %114 = vector.shape_cast %113 : vector<2x8x32xf32> to vector<16x32xf32>
    %c0_48 = arith.constant 0 : index
    %c0_49 = arith.constant 0 : index
    %115 = vector.load %arg8[%c0_48, %c0_49] : memref<32x32xf32, #tpu.memory_space<vmem>>, vector<32x32xf32>
    %cst_50 = arith.constant dense<0.000000e+00> : vector<16x32xf32>
    %116 = tpu.matmul %114, %115, %cst_50 {dimension_numbers = #tpu.dot_dimension_numbers<[1], [0], [0], [1], [0, 0, 1, 1], [], []>} : vector<16x32xf32>, vector<32x32xf32>, vector<16x32xf32> -> vector<16x32xf32>
    %c0_51 = arith.constant 0 : index
    %c0_52 = arith.constant 0 : index
    %117 = vector.load %arg9[%c0_51, %c0_52] : memref<1x32xf32, #tpu.memory_space<vmem>>, vector<1x32xf32>
    %118 = vector.broadcast %117 : vector<1x32xf32> to vector<16x32xf32>
    %119 = arith.addf %116, %118 : vector<16x32xf32>
    %120 = vector.shape_cast %119 : vector<16x32xf32> to vector<2x8x32xf32>
    %c0_53 = arith.constant 0 : index
    %c0_54 = arith.constant 0 : index
    %c0_55 = arith.constant 0 : index
    %121 = vector.load %arg11[%c0_53, %c0_54, %c0_55] : memref<2x8x32xf32, #tpu.memory_space<vmem>>, vector<2x8x32xf32>
    tpu.vector_store %arg11[%c0_53, %c0_54, %c0_55], %120 {strides = array<i32>} : memref<2x8x32xf32, #tpu.memory_space<vmem>>, vector<2x8x32xf32>,
    return
  }
  func.func @transform_0(%arg0: i32) -> (i32, i32, i32) {
    %c0_i32 = arith.constant 0 : i32
    %c0_i32_0 = arith.constant 0 : i32
    %c0_i32_1 = arith.constant 0 : i32
    return %arg0, %c0_i32, %c0_i32_0 : i32, i32, i32
  }
  func.func @transform_1(%arg0: i32) -> (i32, i32) {
    %c0_i32 = arith.constant 0 : i32
    %c0_i32_0 = arith.constant 0 : i32
    %c0_i32_1 = arith.constant 0 : i32
    return %c0_i32, %c0_i32_0 : i32, i32
  }
  func.func @transform_2(%arg0: i32) -> (i32, i32) {
    %c0_i32 = arith.constant 0 : i32
    %c0_i32_0 = arith.constant 0 : i32
    %c0_i32_1 = arith.constant 0 : i32
    return %c0_i32, %c0_i32_0 : i32, i32
  }
  func.func @transform_3(%arg0: i32) -> (i32, i32) {
    %c0_i32 = arith.constant 0 : i32
    %c0_i32_0 = arith.constant 0 : i32
    %c0_i32_1 = arith.constant 0 : i32
    return %c0_i32, %c0_i32_0 : i32, i32
  }
  func.func @transform_4(%arg0: i32) -> (i32, i32) {
    %c0_i32 = arith.constant 0 : i32
    %c0_i32_0 = arith.constant 0 : i32
    %c0_i32_1 = arith.constant 0 : i32
    return %c0_i32, %c0_i32_0 : i32, i32
  }
  func.func @transform_5(%arg0: i32) -> (i32, i32) {
    %c0_i32 = arith.constant 0 : i32
    %c0_i32_0 = arith.constant 0 : i32
    %c0_i32_1 = arith.constant 0 : i32
    return %c0_i32, %c0_i32_0 : i32, i32
  }
  func.func @transform_6(%arg0: i32) -> (i32, i32) {
    %c0_i32 = arith.constant 0 : i32
    %c0_i32_0 = arith.constant 0 : i32
    %c0_i32_1 = arith.constant 0 : i32
    return %c0_i32, %c0_i32_0 : i32, i32
  }
  func.func @transform_7(%arg0: i32) -> (i32, i32) {
    %c0_i32 = arith.constant 0 : i32
    %c0_i32_0 = arith.constant 0 : i32
    %c0_i32_1 = arith.constant 0 : i32
    return %c0_i32, %c0_i32_0 : i32, i32
  }
  func.func @transform_8(%arg0: i32) -> (i32, i32) {
    %c0_i32 = arith.constant 0 : i32
    %c0_i32_0 = arith.constant 0 : i32
    %c0_i32_1 = arith.constant 0 : i32
    return %c0_i32, %c0_i32_0 : i32, i32
  }
  func.func @transform_9(%arg0: i32) -> (i32, i32) {
    %c0_i32 = arith.constant 0 : i32
    %c0_i32_0 = arith.constant 0 : i32
    %c0_i32_1 = arith.constant 0 : i32
    return %c0_i32, %c0_i32_0 : i32, i32
  }
  func.func @transform_10(%arg0: i32) -> (i32, i32, i32) {
    %c0_i32 = arith.constant 0 : i32
    %c0_i32_0 = arith.constant 0 : i32
    %c0_i32_1 = arith.constant 0 : i32
    return %arg0, %c0_i32, %c0_i32_0 : i32, i32, i32
  }
}

</mosaic_0001>

<llo_original>
// kernel: tpu_custom_call.1
$region0: #{tpu_custom_call.1}
  #allocation0 [shape = 'u32[]', space=smem, size = 0x4, offset = 0x4, fixed_abs, tag = 'smem constant byte address 0x4 - core index']
  #allocation1 [shape = 'u32[72,128]{1,0:T(1,128)}', space=vmem, size = 0x9000, scoped, tag = 'internal scratch']
  %s0 = inlined_call_operand.hbm [shape: f32[2,8,32], index: 0, kind: input, shape index: {}]
  %s1 = inlined_call_operand.hbm [shape: f32[32,32], index: 1, kind: input, shape index: {}]
  %s2 = inlined_call_operand.vmem [shape: f32[1,32], index: 2, kind: input, shape index: {}]
  %s3 = inlined_call_operand.hbm [shape: f32[32,32], index: 3, kind: input, shape index: {}]
  %s4 = inlined_call_operand.vmem [shape: f32[1,32], index: 4, kind: input, shape index: {}]
  %s5 = inlined_call_operand.hbm [shape: f32[32,32], index: 5, kind: input, shape index: {}]
  %s6 = inlined_call_operand.vmem [shape: f32[1,32], index: 6, kind: input, shape index: {}]
  %s7 = inlined_call_operand.hbm [shape: f32[32,32], index: 7, kind: input, shape index: {}]
  %s8 = inlined_call_operand.vmem [shape: f32[1,32], index: 8, kind: input, shape index: {}]
  %s9 = inlined_call_operand.hbm [shape: f32[32,32], index: 9, kind: input, shape index: {}]
  %s10 = inlined_call_operand.hbm [shape: f32[2,8,32], index: 10, kind: output, shape index: {}]
  %s11 = sld [smem:[#allocation0]]
  $region74: #{tpu_custom_call.1} parent=0
    _
  %s13 = ssub.s32 1, %s11
  %s14 = scalar_select 0, %s13, %s11
  $region1: #{tpu_custom_call.1} parent=0
    #allocation2 [shape = 'u8[8192]{0}', space=vmem, size = 0x2000, scoped, tag = 'input window, operand 0, single buffered']
    #allocation3 [shape = 's32[1]{0}', space=sflag, size = 0x4, scoped, tag = 'scoped memory for tpu_custom_call.1']
    #allocation4 [shape = 's32[1]{0}', space=sflag, size = 0x4, scoped, tag = 'scoped memory for tpu_custom_call.1']
    #allocation5 [shape = 'u8[16384]{0}', space=vmem, size = 0x4000, scoped, tag = 'input window, operand 1, single buffered']
    #allocation6 [shape = 's32[1]{0}', space=sflag, size = 0x4, scoped, tag = 'scoped memory for tpu_custom_call.1']
    #allocation7 [shape = 'u8[16384]{0}', space=vmem, size = 0x4000, scoped, tag = 'input window, operand 3, single buffered']
    #allocation8 [shape = 'u8[16384]{0}', space=vmem, size = 0x4000, scoped, tag = 'input window, operand 5, single buffered']
    #allocation9 [shape = 's32[1]{0}', space=sflag, size = 0x4, scoped, tag = 'scoped memory for tpu_custom_call.1']
    #allocation10 [shape = 'u8[16384]{0}', space=vmem, size = 0x4000, scoped, tag = 'input window, operand 7, single buffered']
    #allocation11 [shape = 'u8[16384]{0}', space=vmem, size = 0x4000, scoped, tag = 'input window, operand 9, single buffered']
    #allocation12 [shape = 's32[1]{0}', space=sflag, size = 0x4, scoped, tag = 'scoped memory for tpu_custom_call.1']
    #allocation13 [shape = 'u8[8192]{0}', space=vmem, size = 0x2000, scoped, tag = 'output window, operand 0, single buffered']
    %15 = vsyncpa [#allocation3], 0
    %16 = vsyncpa [#allocation6], 0
    %17 = vsyncpa [#allocation9], 0
    %18 = vsyncpa [#allocation12], 0
    %19 = vsyncpa [#allocation4], 0
    // Predicated region
    $region2: #{tpu_custom_call.1} parent=1 // pred_check
      _
    $region3: #{tpu_custom_call.1} parent=1 // pred_check_branch
      %21 = sbr.rel (0) target = $region5
    $region4: #{tpu_custom_call.1} parent=1 // pred_region
      %23 = vsyncadd [#allocation3], 0
      %s24 = sshll.u32 %s0, 4
      %s25 = int_to_ptr.hbm [resolvable:$true] %s24
      %s26 = sshll.u32 [#allocation2], 4
      %s27 = int_to_ptr.vmem [resolvable:$true] %s26
      %32 = dma.hbm_to_vmem [thread:$0]  %s25, 256, %s27, [#allocation3], 128, 128, 8
    $region5: #{tpu_custom_call.1} parent=1 // pred_fallthru
      _
    // Predicated region
    $region6: #{tpu_custom_call.1} parent=1 // pred_check
      _
    $region7: #{tpu_custom_call.1} parent=1 // pred_check_branch
      %34 = sbr.rel (0) target = $region9
    $region8: #{tpu_custom_call.1} parent=1 // pred_region
      %36 = vsyncadd [#allocation6], 0
      %s37 = sshll.u32 %s1, 4
      %s38 = int_to_ptr.hbm [resolvable:$true] %s37
      %s39 = sshll.u32 [#allocation5], 4
      %s40 = int_to_ptr.vmem [resolvable:$true] %s39
      %45 = dma.hbm_to_vmem [thread:$0]  %s38, 512, %s40, [#allocation6], 128, 128, 8
    $region9: #{tpu_custom_call.1} parent=1 // pred_fallthru
      _
    // Predicated region
    $region10: #{tpu_custom_call.1} parent=1 // pred_check
      _
    $region11: #{tpu_custom_call.1} parent=1 // pred_check_branch
      %47 = sbr.rel (0) target = $region13
    $region12: #{tpu_custom_call.1} parent=1 // pred_region
      _
    $region13: #{tpu_custom_call.1} parent=1 // pred_fallthru
      _
    // Predicated region
    $region14: #{tpu_custom_call.1} parent=1 // pred_check
      _
    $region15: #{tpu_custom_call.1} parent=1 // pred_check_branch
      %49 = sbr.rel (0) target = $region17
    $region16: #{tpu_custom_call.1} parent=1 // pred_region
      %51 = vsyncadd [#allocation6], 0
      %s52 = sshll.u32 %s3, 4
      %s53 = int_to_ptr.hbm [resolvable:$true] %s52
      %s54 = sshll.u32 [#allocation7], 4
      %s55 = int_to_ptr.vmem [resolvable:$true] %s54
      %60 = dma.hbm_to_vmem [thread:$0]  %s53, 512, %s55, [#allocation6], 128, 128, 8
    $region17: #{tpu_custom_call.1} parent=1 // pred_fallthru
      _
    // Predicated region
    $region18: #{tpu_custom_call.1} parent=1 // pred_check
      _
    $region19: #{tpu_custom_call.1} parent=1 // pred_check_branch
      %62 = sbr.rel (0) target = $region21
    $region20: #{tpu_custom_call.1} parent=1 // pred_region
      _
    $region21: #{tpu_custom_call.1} parent=1 // pred_fallthru
      _
    // Predicated region
    $region22: #{tpu_custom_call.1} parent=1 // pred_check
      _
    $region23: #{tpu_custom_call.1} parent=1 // pred_check_branch
      %64 = sbr.rel (0) target = $region25
    $region24: #{tpu_custom_call.1} parent=1 // pred_region
      %66 = vsyncadd [#allocation9], 0
      %s67 = sshll.u32 %s5, 4
      %s68 = int_to_ptr.hbm [resolvable:$true] %s67
      %s69 = sshll.u32 [#allocation8], 4
      %s70 = int_to_ptr.vmem [resolvable:$true] %s69
      %75 = dma.hbm_to_vmem [thread:$0]  %s68, 512, %s70, [#allocation9], 128, 128, 8
    $region25: #{tpu_custom_call.1} parent=1 // pred_fallthru
      _
    // Predicated region
    $region26: #{tpu_custom_call.1} parent=1 // pred_check
      _
    $region27: #{tpu_custom_call.1} parent=1 // pred_check_branch
      %77 = sbr.rel (0) target = $region29
    $region28: #{tpu_custom_call.1} parent=1 // pred_region
      _
    $region29: #{tpu_custom_call.1} parent=1 // pred_fallthru
      _
    // Predicated region
    $region30: #{tpu_custom_call.1} parent=1 // pred_check
      _
    $region31: #{tpu_custom_call.1} parent=1 // pred_check_branch
      %79 = sbr.rel (0) target = $region33
    $region32: #{tpu_custom_call.1} parent=1 // pred_region
      %81 = vsyncadd [#allocation9], 0
      %s82 = sshll.u32 %s7, 4
      %s83 = int_to_ptr.hbm [resolvable:$true] %s82
      %s84 = sshll.u32 [#allocation10], 4
      %s85 = int_to_ptr.vmem [resolvable:$true] %s84
      %90 = dma.hbm_to_vmem [thread:$0]  %s83, 512, %s85, [#allocation9], 128, 128, 8
    $region33: #{tpu_custom_call.1} parent=1 // pred_fallthru
      _
    // Predicated region
    $region34: #{tpu_custom_call.1} parent=1 // pred_check
      _
    $region35: #{tpu_custom_call.1} parent=1 // pred_check_branch
      %92 = sbr.rel (0) target = $region37
    $region36: #{tpu_custom_call.1} parent=1 // pred_region
      _
    $region37: #{tpu_custom_call.1} parent=1 // pred_fallthru
      _
    // Predicated region
    $region38: #{tpu_custom_call.1} parent=1 // pred_check
      _
    $region39: #{tpu_custom_call.1} parent=1 // pred_check_branch
      %94 = sbr.rel (0) target = $region41
    $region40: #{tpu_custom_call.1} parent=1 // pred_region
      %96 = vsyncadd [#allocation12], 0
      %s97 = sshll.u32 %s9, 4
      %s98 = int_to_ptr.hbm [resolvable:$true] %s97
      %s99 = sshll.u32 [#allocation11], 4
      %s100 = int_to_ptr.vmem [resolvable:$true] %s99
      %105 = dma.hbm_to_vmem [thread:$0]  %s98, 512, %s100, [#allocation12], 128, 128, 8
    $region41: #{tpu_custom_call.1} parent=1 // pred_fallthru
      _
    // Predicated region
    $region42: #{tpu_custom_call.1} parent=1 // pred_check
      _
    $region43: #{tpu_custom_call.1} parent=1 // pred_check_branch
      %107 = sbr.rel (0) target = $region45
    $region44: #{tpu_custom_call.1} parent=1 // pred_region
      %109 = dma.done [#allocation3], 256
    $region45: #{tpu_custom_call.1} parent=1 // pred_fallthru
      _
    // Predicated region
    $region46: #{tpu_custom_call.1} parent=1 // pred_check
      _
    $region47: #{tpu_custom_call.1} parent=1 // pred_check_branch
      %111 = sbr.rel (0) target = $region49
    $region48: #{tpu_custom_call.1} parent=1 // pred_region
      %113 = dma.done [#allocation6], 512
    $region49: #{tpu_custom_call.1} parent=1 // pred_fallthru
      _
    // Predicated region
    $region50: #{tpu_custom_call.1} parent=1 // pred_check
      _
    $region51: #{tpu_custom_call.1} parent=1 // pred_check_branch
      %115 = sbr.rel (0) target = $region53
    $region52: #{tpu_custom_call.1} parent=1 // pred_region
      %117 = dma.done [#allocation6], 512
    $region53: #{tpu_custom_call.1} parent=1 // pred_fallthru
      _
    // Predicated region
    $region54: #{tpu_custom_call.1} parent=1 // pred_check
      _
    $region55: #{tpu_custom_call.1} parent=1 // pred_check_branch
      %119 = sbr.rel (0) target = $region57
    $region56: #{tpu_custom_call.1} parent=1 // pred_region
      %121 = dma.done [#allocation9], 512
    $region57: #{tpu_custom_call.1} parent=1 // pred_fallthru
      _
    // Predicated region
    $region58: #{tpu_custom_call.1} parent=1 // pred_check
      _
    $region59: #{tpu_custom_call.1} parent=1 // pred_check_branch
      %123 = sbr.rel (0) target = $region61
    $region60: #{tpu_custom_call.1} parent=1 // pred_region
      %125 = dma.done [#allocation9], 512
    $region61: #{tpu_custom_call.1} parent=1 // pred_fallthru
      _
    // Predicated region
    $region62: #{tpu_custom_call.1} parent=1 // pred_check
      _
    $region63: #{tpu_custom_call.1} parent=1 // pred_check_branch
      %127 = sbr.rel (0) target = $region65
    $region64: #{tpu_custom_call.1} parent=1 // pred_region
      %129 = dma.done [#allocation12], 512
    $region65: #{tpu_custom_call.1} parent=1 // pred_fallthru
      _
    %v130 = vld [vmem:[#allocation2] sm:$0xff]
    %v131 = vld [vmem:[#allocation2 + $0x8] sm:$0xff]
    %v132 = vld [vmem:[#allocation5] sm:$0xff]
    %v133 = vld [vmem:[#allocation5 + $0x8] sm:$0xff]
    %v134 = vld [vmem:[#allocation5 + $0x10] sm:$0xff]
    %v135 = vld [vmem:[#allocation5 + $0x18] sm:$0xff]
    %v136 = vld [vmem:[%s2] sm:$0x1]
    %v138 = vperm.slane %v136, 0
    %vm140 = vcmask 261120
    %v142 = vsel %vm140, %v130, 0
    %v145 = vsel %vm140, %v131, 0
    %147 = vmatpush.msra.mxu0 0.0
    %148 = vmatpush.msra.mxu0 0.0
    %149 = vmatpush.msra.mxu0 0.0
    %150 = vmatpush.msra.mxu0 0.0
    %151 = vmatpush.msra.mxu0 0.0
    %152 = vmatpush.msra.mxu0 0.0
    %153 = vmatpush.msra.mxu0 0.0
    %154 = vmatpush.msra.mxu0 0.0
    %155 = vmatpush.msra.mxu0 0.0
    %156 = vmatpush.msra.mxu0 0.0
    %157 = vmatpush.msra.mxu0 0.0
    %158 = vmatpush.msra.mxu0 0.0
    %159 = vmatpush.msra.mxu0 %v135
    %160 = vmatpush.msra.mxu0 %v134
    %161 = vmatpush.msra.mxu0 %v133
    %162 = vmatpush.msra.mxu0 %v132
    %163 = vmatmul.f32.gmra.mxu0 %v142
    %v164 = vpop.f32.mrf.mxu0
    %v165 = vadd.f32 %v138, %v164
    %166 = vmatmul.f32.gmra.mxu0 %v145
    %v167 = vpop.f32.mrf.mxu0
    %v168 = vadd.f32 %v138, %v167
    %169 = vdwg.mxu0
    %v170 = vxor.u32 %v165, 2147483648
    %v171 = vxor.u32 %v168, 2147483648
    %v172 = vmul.f32 %v170, 1.442695
    %v173 = vpow.pop %v172
    %v174 = vmul.f32 %v171, 1.442695
    %v175 = vpow.pop %v174
    %v176 = vadd.f32 %v173, 1.0
    %v177 = vadd.f32 %v175, 1.0
    %v178 = vrcp.pop %v176
    %v179 = vmul.f32 %v176, %v178
    %v180 = vsub.f32 1.0, %v179
    %v181 = vmul.f32 %v178, %v180
    %v182 = vadd.f32 %v178, %v181
    %vm183 = vweird.f32 %v176
    %vm184 = vweird.f32 %v178
    %vm185 = vmor %vm183, %vm184
    %v186 = vsel %vm185, %v178, %v182
    %v187 = vand.u32 2147483647, %v176
    %vm188 = vcmp.eq.f32.partialorder %v187, 8.507059e+37
    %v189 = vand.u32 %v176, 2147483648
    %v190 = vor.u32 1.1754944e-38, %v189
    %v191 = vsel %vm188, %v190, %v186
    %v192 = vmul.f32 1.0, %v191
    %v193 = vrcp.pop %v177
    %v194 = vmul.f32 %v177, %v193
    %v195 = vsub.f32 1.0, %v194
    %v196 = vmul.f32 %v193, %v195
    %v197 = vadd.f32 %v193, %v196
    %vm198 = vweird.f32 %v177
    %vm199 = vweird.f32 %v193
    %vm200 = vmor %vm198, %vm199
    %v201 = vsel %vm200, %v193, %v197
    %v202 = vand.u32 2147483647, %v177
    %vm203 = vcmp.eq.f32.partialorder %v202, 8.507059e+37
    %v204 = vand.u32 %v177, 2147483648
    %v205 = vor.u32 1.1754944e-38, %v204
    %v206 = vsel %vm203, %v205, %v201
    %v207 = vmul.f32 1.0, %v206
    %v208 = vld [vmem:[#allocation7] sm:$0xff]
    %v209 = vld [vmem:[#allocation7 + $0x8] sm:$0xff]
    %v210 = vld [vmem:[#allocation7 + $0x10] sm:$0xff]
    %v211 = vld [vmem:[#allocation7 + $0x18] sm:$0xff]
    %v212 = vld [vmem:[%s4] sm:$0x1]
    %v214 = vperm.slane %v212, 0
    %216 = vmatpush.msra.mxu0 0.0
    %217 = vmatpush.msra.mxu0 0.0
    %218 = vmatpush.msra.mxu0 0.0
    %219 = vmatpush.msra.mxu0 0.0
    %220 = vmatpush.msra.mxu0 0.0
    %221 = vmatpush.msra.mxu0 0.0
    %222 = vmatpush.msra.mxu0 0.0
    %223 = vmatpush.msra.mxu0 0.0
    %224 = vmatpush.msra.mxu0 0.0
    %225 = vmatpush.msra.mxu0 0.0
    %226 = vmatpush.msra.mxu0 0.0
    %227 = vmatpush.msra.mxu0 0.0
    %228 = vmatpush.msra.mxu0 %v211
    %229 = vmatpush.msra.mxu0 %v210
    %230 = vmatpush.msra.mxu0 %v209
    %231 = vmatpush.msra.mxu0 %v208
    %232 = vmatmul.f32.gmra.mxu0 %v142
    %v233 = vpop.f32.mrf.mxu0
    %v234 = vadd.f32 %v214, %v233
    %235 = vmatmul.f32.gmra.mxu0 %v145
    %v236 = vpop.f32.mrf.mxu0
    %v237 = vadd.f32 %v214, %v236
    %238 = vdwg.mxu0
    %v239 = vxor.u32 %v234, 2147483648
    %v240 = vxor.u32 %v237, 2147483648
    %v241 = vmul.f32 %v239, 1.442695
    %v242 = vpow.pop %v241
    %v243 = vmul.f32 %v240, 1.442695
    %v244 = vpow.pop %v243
    %v245 = vadd.f32 %v242, 1.0
    %v246 = vadd.f32 %v244, 1.0
    %v247 = vrcp.pop %v245
    %v248 = vmul.f32 %v245, %v247
    %v249 = vsub.f32 1.0, %v248
    %v250 = vmul.f32 %v247, %v249
    %v251 = vadd.f32 %v247, %v250
    %vm252 = vweird.f32 %v245
    %vm253 = vweird.f32 %v247
    %vm254 = vmor %vm252, %vm253
    %v255 = vsel %vm254, %v247, %v251
    %v256 = vand.u32 2147483647, %v245
    %vm257 = vcmp.eq.f32.partialorder %v256, 8.507059e+37
    %v258 = vand.u32 %v245, 2147483648
    %v259 = vor.u32 1.1754944e-38, %v258
    %v260 = vsel %vm257, %v259, %v255
    %v261 = vmul.f32 1.0, %v260
    %v262 = vrcp.pop %v246
    %v263 = vmul.f32 %v246, %v262
    %v264 = vsub.f32 1.0, %v263
    %v265 = vmul.f32 %v262, %v264
    %v266 = vadd.f32 %v262, %v265
    %vm267 = vweird.f32 %v246
    %vm268 = vweird.f32 %v262
    %vm269 = vmor %vm267, %vm268
    %v270 = vsel %vm269, %v262, %v266
    %v271 = vand.u32 2147483647, %v246
    %vm272 = vcmp.eq.f32.partialorder %v271, 8.507059e+37
    %v273 = vand.u32 %v246, 2147483648
    %v274 = vor.u32 1.1754944e-38, %v273
    %v275 = vsel %vm272, %v274, %v270
    %v276 = vmul.f32 1.0, %v275
    %v277 = vld [vmem:[#allocation8] sm:$0xff]
    %v278 = vld [vmem:[#allocation8 + $0x8] sm:$0xff]
    %v279 = vld [vmem:[#allocation8 + $0x10] sm:$0xff]
    %v280 = vld [vmem:[#allocation8 + $0x18] sm:$0xff]
    %v281 = vld [vmem:[%s6] sm:$0x1]
    %v283 = vperm.slane %v281, 0
    %285 = vmatpush.msra.mxu0 0.0
    %286 = vmatpush.msra.mxu0 0.0
    %287 = vmatpush.msra.mxu0 0.0
    %288 = vmatpush.msra.mxu0 0.0
    %289 = vmatpush.msra.mxu0 0.0
    %290 = vmatpush.msra.mxu0 0.0
    %291 = vmatpush.msra.mxu0 0.0
    %292 = vmatpush.msra.mxu0 0.0
    %293 = vmatpush.msra.mxu0 0.0
    %294 = vmatpush.msra.mxu0 0.0
    %295 = vmatpush.msra.mxu0 0.0
    %296 = vmatpush.msra.mxu0 0.0
    %297 = vmatpush.msra.mxu0 %v280
    %298 = vmatpush.msra.mxu0 %v279
    %299 = vmatpush.msra.mxu0 %v278
    %300 = vmatpush.msra.mxu0 %v277
    %301 = vmatmul.f32.gmra.mxu0 %v142
    %v302 = vpop.f32.mrf.mxu0
    %v303 = vadd.f32 %v283, %v302
    %304 = vmatmul.f32.gmra.mxu0 %v145
    %v305 = vpop.f32.mrf.mxu0
    %v306 = vadd.f32 %v283, %v305
    %307 = vdwg.mxu0
    %v308 = vld [vmem:[#allocation11] sm:$0xff]
    %v309 = vld [vmem:[#allocation11 + $0x8] sm:$0xff]
    %v310 = vld [vmem:[#allocation11 + $0x10] sm:$0xff]
    %v311 = vld [vmem:[#allocation11 + $0x18] sm:$0xff]
    %v312 = vadd.f32 %v192, 1e-06
    %v313 = vadd.f32 %v207, 1e-06
    %v314 = vadd.f32 %v261, 1e-06
    %v315 = vadd.f32 %v276, 1e-06
    %v316 = vsel %vm140, %v261, 0.0
    %v317 = vrot.slane %v316, 4
    %v318 = vadd.f32 %v316, %v317
    %v319 = vrot.slane %v318, 2
    %v320 = vadd.f32 %v318, %v319
    %v321 = vrot.slane %v320, 1
    %v322 = vadd.f32 %v320, %v321
    %v323 = vsel %vm140, %v276, 0.0
    %v324 = vrot.slane %v323, 4
    %v325 = vadd.f32 %v323, %v324
    %v326 = vrot.slane %v325, 2
    %v327 = vadd.f32 %v325, %v326
    %v328 = vrot.slane %v327, 1
    %v329 = vadd.f32 %v327, %v328
    %v330 = vsel %vm140, %v192, 0.0
    %v331 = vrot.slane %v330, 4
    %v332 = vadd.f32 %v330, %v331
    %v333 = vrot.slane %v332, 2
    %v334 = vadd.f32 %v332, %v333
    %v335 = vrot.slane %v334, 1
    %v336 = vadd.f32 %v334, %v335
    %v337 = vsel %vm140, %v207, 0.0
    %v338 = vrot.slane %v337, 4
    %v339 = vadd.f32 %v337, %v338
    %v340 = vrot.slane %v339, 2
    %v341 = vadd.f32 %v339, %v340
    %v342 = vrot.slane %v341, 1
    %v343 = vadd.f32 %v341, %v342
    %v344 = vadd.f32 %v322, 1e-06
    %v345 = vadd.f32 %v329, 1e-06
    %v346 = vmul.f32 %v312, %v344
    %v347 = vmul.f32 %v313, %v345
    %v349 = vsel %vm140, %v346, 0
    %v352 = vsel %vm140, %v347, 0
    %354 = vmatpush.msra.mxu0 0.0
    %355 = vmatpush.msra.mxu0 0.0
    %356 = vmatpush.msra.mxu0 0.0
    %357 = vmatpush.msra.mxu0 0.0
    %358 = vmatpush.msra.mxu0 0.0
    %359 = vmatpush.msra.mxu0 0.0
    %360 = vmatpush.msra.mxu0 0.0
    %361 = vmatpush.msra.mxu0 0.0
    %362 = vmatpush.msra.mxu0 0.0
    %363 = vmatpush.msra.mxu0 0.0
    %364 = vmatpush.msra.mxu0 0.0
    %365 = vmatpush.msra.mxu0 0.0
    %366 = vmatpush.msra.mxu0 %v311
    %367 = vmatpush.msra.mxu0 %v310
    %368 = vmatpush.msra.mxu0 %v309
    %369 = vmatpush.msra.mxu0 %v308
    %370 = vmatmul.f32.gmra.mxu0 %v349
    %v371 = vpop.f32.mrf.mxu0
    %v372 = vadd.f32 0.0, %v371
    %373 = vmatmul.f32.gmra.mxu0 %v352
    %v374 = vpop.f32.mrf.mxu0
    %v375 = vadd.f32 0.0, %v374
    %376 = vdwg.mxu0
    %v377 = vadd.f32 %v372, 1e-06
    %v378 = vadd.f32 %v375, 1e-06
    %v379 = vrcp.pop %v377
    %v380 = vmul.f32 %v377, %v379
    %v381 = vsub.f32 1.0, %v380
    %v382 = vmul.f32 %v379, %v381
    %v383 = vadd.f32 %v379, %v382
    %vm384 = vweird.f32 %v377
    %vm385 = vweird.f32 %v379
    %vm386 = vmor %vm384, %vm385
    %v387 = vsel %vm386, %v379, %v383
    %v388 = vand.u32 2147483647, %v377
    %vm389 = vcmp.eq.f32.partialorder %v388, 8.507059e+37
    %v390 = vand.u32 %v377, 2147483648
    %v391 = vor.u32 1.1754944e-38, %v390
    %v392 = vsel %vm389, %v391, %v387
    %v393 = vmul.f32 1.0, %v392
    %v394 = vrcp.pop %v378
    %v395 = vmul.f32 %v378, %v394
    %v396 = vsub.f32 1.0, %v395
    %v397 = vmul.f32 %v394, %v396
    %v398 = vadd.f32 %v394, %v397
    %vm399 = vweird.f32 %v378
    %vm400 = vweird.f32 %v394
    %vm401 = vmor %vm399, %vm400
    %v402 = vsel %vm401, %v394, %v398
    %v403 = vand.u32 2147483647, %v378
    %vm404 = vcmp.eq.f32.partialorder %v403, 8.507059e+37
    %v405 = vand.u32 %v378, 2147483648
    %v406 = vor.u32 1.1754944e-38, %v405
    %v407 = vsel %vm404, %v406, %v402
    %v408 = vmul.f32 1.0, %v407
    %v409 = vadd.f32 %v336, 1e-06
    %v410 = vadd.f32 %v343, 1e-06
    %v411 = vmul.f32 %v314, %v409
    %v412 = vmul.f32 %v315, %v410
    %v414 = vsel %vm140, %v411, 0
    %v417 = vsel %vm140, %v412, 0
    %419 = vmatpush.msra.mxu0 0.0
    %420 = vmatpush.msra.mxu0 0.0
    %421 = vmatpush.msra.mxu0 0.0
    %422 = vmatpush.msra.mxu0 0.0
    %423 = vmatpush.msra.mxu0 0.0
    %424 = vmatpush.msra.mxu0 0.0
    %425 = vmatpush.msra.mxu0 0.0
    %426 = vmatpush.msra.mxu0 0.0
    %427 = vmatpush.msra.mxu0 0.0
    %428 = vmatpush.msra.mxu0 0.0
    %429 = vmatpush.msra.mxu0 0.0
    %430 = vmatpush.msra.mxu0 0.0
    %431 = vmatpush.msra.mxu0 %v311
    %432 = vmatpush.msra.mxu0 %v310
    %433 = vmatpush.msra.mxu0 %v309
    %434 = vmatpush.msra.mxu0 %v308
    %435 = vmatmul.f32.gmra.mxu0 %v414
    %v436 = vpop.f32.mrf.mxu0
    %v437 = vadd.f32 0.0, %v436
    %438 = vmatmul.f32.gmra.mxu0 %v417
    %v439 = vpop.f32.mrf.mxu0
    %v440 = vadd.f32 0.0, %v439
    %441 = vdwg.mxu0
    %v442 = vadd.f32 %v437, 1e-06
    %v443 = vadd.f32 %v440, 1e-06
    %v444 = vrcp.pop %v442
    %v445 = vmul.f32 %v442, %v444
    %v446 = vsub.f32 1.0, %v445
    %v447 = vmul.f32 %v444, %v446
    %v448 = vadd.f32 %v444, %v447
    %vm449 = vweird.f32 %v442
    %vm450 = vweird.f32 %v444
    %vm451 = vmor %vm449, %vm450
    %v452 = vsel %vm451, %v444, %v448
    %v453 = vand.u32 2147483647, %v442
    %vm454 = vcmp.eq.f32.partialorder %v453, 8.507059e+37
    %v455 = vand.u32 %v442, 2147483648
    %v456 = vor.u32 1.1754944e-38, %v455
    %v457 = vsel %vm454, %v456, %v452
    %v458 = vmul.f32 1.0, %v457
    %v459 = vrcp.pop %v443
    %v460 = vmul.f32 %v443, %v459
    %v461 = vsub.f32 1.0, %v460
    %v462 = vmul.f32 %v459, %v461
    %v463 = vadd.f32 %v459, %v462
    %vm464 = vweird.f32 %v443
    %vm465 = vweird.f32 %v459
    %vm466 = vmor %vm464, %vm465
    %v467 = vsel %vm466, %v459, %v463
    %v468 = vand.u32 2147483647, %v443
    %vm469 = vcmp.eq.f32.partialorder %v468, 8.507059e+37
    %v470 = vand.u32 %v443, 2147483648
    %v471 = vor.u32 1.1754944e-38, %v470
    %v472 = vsel %vm469, %v471, %v467
    %v473 = vmul.f32 1.0, %v472
    %v474 = vmul.f32 %v261, %v458
    %v475 = vmul.f32 %v276, %v473
    %v476 = vsel %vm140, %v474, 0.0
    %v477 = vrot.slane %v476, 4
    %v478 = vadd.f32 %v476, %v477
    %v479 = vrot.slane %v478, 2
    %v480 = vadd.f32 %v478, %v479
    %v481 = vrot.slane %v480, 1
    %v482 = vadd.f32 %v480, %v481
    %v483 = vsel %vm140, %v475, 0.0
    %v484 = vrot.slane %v483, 4
    %v485 = vadd.f32 %v483, %v484
    %v486 = vrot.slane %v485, 2
    %v487 = vadd.f32 %v485, %v486
    %v488 = vrot.slane %v487, 1
    %v489 = vadd.f32 %v487, %v488
    %v490 = vadd.f32 %v482, 1e-06
    %v491 = vadd.f32 %v489, 1e-06
    %v492 = vmul.f32 %v312, %v490
    %v493 = vmul.f32 %v313, %v491
    %v495 = vsel %vm140, %v492, 0
    %v498 = vsel %vm140, %v493, 0
    %500 = vmatpush.msra.mxu0 0.0
    %501 = vmatpush.msra.mxu0 0.0
    %502 = vmatpush.msra.mxu0 0.0
    %503 = vmatpush.msra.mxu0 0.0
    %504 = vmatpush.msra.mxu0 0.0
    %505 = vmatpush.msra.mxu0 0.0
    %506 = vmatpush.msra.mxu0 0.0
    %507 = vmatpush.msra.mxu0 0.0
    %508 = vmatpush.msra.mxu0 0.0
    %509 = vmatpush.msra.mxu0 0.0
    %510 = vmatpush.msra.mxu0 0.0
    %511 = vmatpush.msra.mxu0 0.0
    %512 = vmatpush.msra.mxu0 %v311
    %513 = vmatpush.msra.mxu0 %v310
    %514 = vmatpush.msra.mxu0 %v309
    %515 = vmatpush.msra.mxu0 %v308
    %516 = vmatmul.f32.gmra.mxu0 %v495
    %v517 = vpop.f32.mrf.mxu0
    %v518 = vadd.f32 0.0, %v517
    %519 = vmatmul.f32.gmra.mxu0 %v498
    %v520 = vpop.f32.mrf.mxu0
    %v521 = vadd.f32 0.0, %v520
    %522 = vdwg.mxu0
    %v523 = vadd.f32 %v518, 1e-06
    %v524 = vadd.f32 %v521, 1e-06
    %v525 = vmul.f32 %v192, %v393
    %v526 = vmul.f32 %v207, %v408
    %v527 = vsel %vm140, %v525, 0.0
    %v528 = vrot.slane %v527, 4
    %v529 = vadd.f32 %v527, %v528
    %v530 = vrot.slane %v529, 2
    %v531 = vadd.f32 %v529, %v530
    %v532 = vrot.slane %v531, 1
    %v533 = vadd.f32 %v531, %v532
    %v534 = vsel %vm140, %v526, 0.0
    %v535 = vrot.slane %v534, 4
    %v536 = vadd.f32 %v534, %v535
    %v537 = vrot.slane %v536, 2
    %v538 = vadd.f32 %v536, %v537
    %v539 = vrot.slane %v538, 1
    %v540 = vadd.f32 %v538, %v539
    %v541 = vadd.f32 %v533, 1e-06
    %v542 = vadd.f32 %v540, 1e-06
    %v543 = vmul.f32 %v314, %v541
    %v544 = vmul.f32 %v315, %v542
    %v546 = vsel %vm140, %v543, 0
    %v549 = vsel %vm140, %v544, 0
    %551 = vmatpush.msra.mxu0 0.0
    %552 = vmatpush.msra.mxu0 0.0
    %553 = vmatpush.msra.mxu0 0.0
    %554 = vmatpush.msra.mxu0 0.0
    %555 = vmatpush.msra.mxu0 0.0
    %556 = vmatpush.msra.mxu0 0.0
    %557 = vmatpush.msra.mxu0 0.0
    %558 = vmatpush.msra.mxu0 0.0
    %559 = vmatpush.msra.mxu0 0.0
    %560 = vmatpush.msra.mxu0 0.0
    %561 = vmatpush.msra.mxu0 0.0
    %562 = vmatpush.msra.mxu0 0.0
    %563 = vmatpush.msra.mxu0 %v311
    %564 = vmatpush.msra.mxu0 %v310
    %565 = vmatpush.msra.mxu0 %v309
    %566 = vmatpush.msra.mxu0 %v308
    %567 = vmatmul.f32.gmra.mxu0 %v546
    %v568 = vpop.f32.mrf.mxu0
    %v569 = vadd.f32 0.0, %v568
    %570 = vmatmul.f32.gmra.mxu0 %v549
    %v571 = vpop.f32.mrf.mxu0
    %v572 = vadd.f32 0.0, %v571
    %573 = vdwg.mxu0
    %v574 = vadd.f32 %v569, 1e-06
    %v575 = vadd.f32 %v572, 1e-06
    %v576 = vmax.f32 %v574, -1.0
    %v577 = vmax.f32 %v575, -1.0
    %v578 = vmin.f32 %v576, 1.0
    %v579 = vmin.f32 %v577, 1.0
    %v580 = vxor.u32 %v523, 2147483648
    %v581 = vxor.u32 %v524, 2147483648
    %v582 = vmul.f32 %v580, 1.442695
    %v583 = vpow.pop %v582
    %v584 = vmul.f32 %v581, 1.442695
    %v585 = vpow.pop %v584
    %v586 = vadd.f32 %v583, 1.0
    %v587 = vadd.f32 %v585, 1.0
    %v588 = vrcp.pop %v586
    %v589 = vmul.f32 %v586, %v588
    %v590 = vsub.f32 1.0, %v589
    %v591 = vmul.f32 %v588, %v590
    %v592 = vadd.f32 %v588, %v591
    %vm593 = vweird.f32 %v586
    %vm594 = vweird.f32 %v588
    %vm595 = vmor %vm593, %vm594
    %v596 = vsel %vm595, %v588, %v592
    %v597 = vand.u32 2147483647, %v586
    %vm598 = vcmp.eq.f32.partialorder %v597, 8.507059e+37
    %v599 = vand.u32 %v586, 2147483648
    %v600 = vor.u32 1.1754944e-38, %v599
    %v601 = vsel %vm598, %v600, %v596
    %v602 = vmul.f32 1.0, %v601
    %v603 = vrcp.pop %v587
    %v604 = vmul.f32 %v587, %v603
    %v605 = vsub.f32 1.0, %v604
    %v606 = vmul.f32 %v603, %v605
    %v607 = vadd.f32 %v603, %v606
    %vm608 = vweird.f32 %v587
    %vm609 = vweird.f32 %v603
    %vm610 = vmor %vm608, %vm609
    %v611 = vsel %vm610, %v603, %v607
    %v612 = vand.u32 2147483647, %v587
    %vm613 = vcmp.eq.f32.partialorder %v612, 8.507059e+37
    %v614 = vand.u32 %v587, 2147483648
    %v615 = vor.u32 1.1754944e-38, %v614
    %v616 = vsel %vm613, %v615, %v611
    %v617 = vmul.f32 1.0, %v616
    %v618 = vsel %vm140, %v578, -inf
    %v619 = vrot.slane %v618, 4
    %v620 = vmax.f32 %v618, %v619
    %v621 = vrot.slane %v620, 2
    %v622 = vmax.f32 %v620, %v621
    %v623 = vrot.slane %v622, 1
    %v624 = vmax.f32 %v622, %v623
    %v625 = vsel %vm140, %v579, -inf
    %v626 = vrot.slane %v625, 4
    %v627 = vmax.f32 %v625, %v626
    %v628 = vrot.slane %v627, 2
    %v629 = vmax.f32 %v627, %v628
    %v630 = vrot.slane %v629, 1
    %v631 = vmax.f32 %v629, %v630
    %v632 = vsub.f32 %v578, %v624
    %v633 = vsub.f32 %v579, %v631
    %v634 = vmul.f32 %v632, 1.442695
    %v635 = vpow.pop %v634
    %v636 = vmul.f32 %v633, 1.442695
    %v637 = vpow.pop %v636
    %v638 = vsel %vm140, %v635, 0.0
    %v639 = vrot.slane %v638, 4
    %v640 = vadd.f32 %v638, %v639
    %v641 = vrot.slane %v640, 2
    %v642 = vadd.f32 %v640, %v641
    %v643 = vrot.slane %v642, 1
    %v644 = vadd.f32 %v642, %v643
    %v645 = vsel %vm140, %v637, 0.0
    %v646 = vrot.slane %v645, 4
    %v647 = vadd.f32 %v645, %v646
    %v648 = vrot.slane %v647, 2
    %v649 = vadd.f32 %v647, %v648
    %v650 = vrot.slane %v649, 1
    %v651 = vadd.f32 %v649, %v650
    %v652 = vrcp.pop %v644
    %v653 = vmul.f32 %v644, %v652
    %v654 = vsub.f32 1.0, %v653
    %v655 = vmul.f32 %v652, %v654
    %v656 = vadd.f32 %v652, %v655
    %vm657 = vweird.f32 %v644
    %vm658 = vweird.f32 %v652
    %vm659 = vmor %vm657, %vm658
    %v660 = vsel %vm659, %v652, %v656
    %v661 = vand.u32 2147483647, %v644
    %vm662 = vcmp.eq.f32.partialorder %v661, 8.507059e+37
    %v663 = vand.u32 %v644, 2147483648
    %v664 = vor.u32 1.1754944e-38, %v663
    %v665 = vsel %vm662, %v664, %v660
    %v666 = vmul.f32 %v635, %v665
    %v667 = vrcp.pop %v651
    %v668 = vmul.f32 %v651, %v667
    %v669 = vsub.f32 1.0, %v668
    %v670 = vmul.f32 %v667, %v669
    %v671 = vadd.f32 %v667, %v670
    %vm672 = vweird.f32 %v651
    %vm673 = vweird.f32 %v667
    %vm674 = vmor %vm672, %vm673
    %v675 = vsel %vm674, %v667, %v671
    %v676 = vand.u32 2147483647, %v651
    %vm677 = vcmp.eq.f32.partialorder %v676, 8.507059e+37
    %v678 = vand.u32 %v651, 2147483648
    %v679 = vor.u32 1.1754944e-38, %v678
    %v680 = vsel %vm677, %v679, %v675
    %v681 = vmul.f32 %v637, %v680
    %v682 = vmul.f32 %v666, 8.0
    %v683 = vmul.f32 %v681, 8.0
    %v684 = vmul.f32 %v303, %v682
    %v685 = vmul.f32 %v306, %v683
    %686 = vxpose.xlu0.b32.start [1/16] %v261, 128
    %687 = vxpose.xlu0.b32.cont [2/16] 0.0, 128
    %688 = vxpose.xlu0.b32.cont [3/16] 0.0, 128
    %689 = vxpose.xlu0.b32.cont [4/16] 0.0, 128
    %690 = vxpose.xlu0.b32.cont [5/16] 0.0, 128
    %691 = vxpose.xlu0.b32.cont [6/16] 0.0, 128
    %692 = vxpose.xlu0.b32.cont [7/16] 0.0, 128
    %693 = vxpose.xlu0.b32.cont [8/16] 0.0, 128
    %694 = vxpose.xlu0.b32.cont [9/16] 0.0, 128
    %695 = vxpose.xlu0.b32.cont [10/16] 0.0, 128
    %696 = vxpose.xlu0.b32.cont [11/16] 0.0, 128
    %697 = vxpose.xlu0.b32.cont [12/16] 0.0, 128
    %698 = vxpose.xlu0.b32.cont [13/16] 0.0, 128
    %699 = vxpose.xlu0.b32.cont [14/16] 0.0, 128
    %700 = vxpose.xlu0.b32.cont [15/16] 0.0, 128
    %701 = vxpose.xlu0.b32.end [16/16] 0.0, 128
    %v702 = vpop.trf.xlu0
    %v703 = vpop.trf.xlu0
    %v704 = vpop.trf.xlu0
    %v705 = vpop.trf.xlu0
    %v706 = vpop.trf.xlu0
    %v707 = vpop.trf.xlu0
    %v708 = vpop.trf.xlu0
    %v709 = vpop.trf.xlu0
    %v710 = vpop.trf.xlu0
    %v711 = vpop.trf.xlu0
    %v712 = vpop.trf.xlu0
    %v713 = vpop.trf.xlu0
    %v714 = vpop.trf.xlu0
    %v715 = vpop.trf.xlu0
    %v716 = vpop.trf.xlu0
    %v717 = vpop.trf.xlu0
    %718 = vxpose.xlu0.b32.start [1/16] %v276, 128
    %719 = vxpose.xlu0.b32.cont [2/16] 0.0, 128
    %720 = vxpose.xlu0.b32.cont [3/16] 0.0, 128
    %721 = vxpose.xlu0.b32.cont [4/16] 0.0, 128
    %722 = vxpose.xlu0.b32.cont [5/16] 0.0, 128
    %723 = vxpose.xlu0.b32.cont [6/16] 0.0, 128
    %724 = vxpose.xlu0.b32.cont [7/16] 0.0, 128
    %725 = vxpose.xlu0.b32.cont [8/16] 0.0, 128
    %726 = vxpose.xlu0.b32.cont [9/16] 0.0, 128
    %727 = vxpose.xlu0.b32.cont [10/16] 0.0, 128
    %728 = vxpose.xlu0.b32.cont [11/16] 0.0, 128
    %729 = vxpose.xlu0.b32.cont [12/16] 0.0, 128
    %730 = vxpose.xlu0.b32.cont [13/16] 0.0, 128
    %731 = vxpose.xlu0.b32.cont [14/16] 0.0, 128
    %732 = vxpose.xlu0.b32.cont [15/16] 0.0, 128
    %733 = vxpose.xlu0.b32.end [16/16] 0.0, 128
    %v734 = vpop.trf.xlu0
    %v735 = vpop.trf.xlu0
    %v736 = vpop.trf.xlu0
    %v737 = vpop.trf.xlu0
    %v738 = vpop.trf.xlu0
    %v739 = vpop.trf.xlu0
    %v740 = vpop.trf.xlu0
    %v741 = vpop.trf.xlu0
    %v742 = vpop.trf.xlu0
    %v743 = vpop.trf.xlu0
    %v744 = vpop.trf.xlu0
    %v745 = vpop.trf.xlu0
    %v746 = vpop.trf.xlu0
    %v747 = vpop.trf.xlu0
    %v748 = vpop.trf.xlu0
    %v749 = vpop.trf.xlu0
    %vm750 = vcmask 64512
    %v752 = vsel %vm750, %v702, 0
    %v755 = vsel %vm750, %v703, 0
    %v758 = vsel %vm750, %v704, 0
    %v761 = vsel %vm750, %v705, 0
    %763 = vmatpush.msra.mxu0 0.0
    %764 = vmatpush.msra.mxu0 0.0
    %765 = vmatpush.msra.mxu0 0.0
    %766 = vmatpush.msra.mxu0 0.0
    %767 = vmatpush.msra.mxu0 0.0
    %768 = vmatpush.msra.mxu0 0.0
    %769 = vmatpush.msra.mxu0 0.0
    %770 = vmatpush.msra.mxu0 0.0
    %771 = vmatpush.msra.mxu0 0.0
    %772 = vmatpush.msra.mxu0 0.0
    %773 = vmatpush.msra.mxu0 0.0
    %774 = vmatpush.msra.mxu0 0.0
    %775 = vmatpush.msra.mxu0 0.0
    %776 = vmatpush.msra.mxu0 0.0
    %777 = vmatpush.msra.mxu0 0.0
    %778 = vmatpush.msra.mxu0 %v684
    %779 = vmatmul.f32.gmra.mxu0 %v752
    %v780 = vpop.f32.mrf.mxu0
    %v781 = vadd.f32 0.0, %v780
    %782 = vmatmul.f32.gmra.mxu0 %v755
    %v783 = vpop.f32.mrf.mxu0
    %v784 = vadd.f32 0.0, %v783
    %785 = vmatmul.f32.gmra.mxu0 %v758
    %v786 = vpop.f32.mrf.mxu0
    %v787 = vadd.f32 0.0, %v786
    %788 = vmatmul.f32.gmra.mxu0 %v761
    %v789 = vpop.f32.mrf.mxu0
    %v790 = vadd.f32 0.0, %v789
    %791 = vdwg.mxu0
    %v793 = vsel %vm750, %v734, 0
    %v796 = vsel %vm750, %v735, 0
    %v799 = vsel %vm750, %v736, 0
    %v802 = vsel %vm750, %v737, 0
    %804 = vmatpush.msra.mxu0 0.0
    %805 = vmatpush.msra.mxu0 0.0
    %806 = vmatpush.msra.mxu0 0.0
    %807 = vmatpush.msra.mxu0 0.0
    %808 = vmatpush.msra.mxu0 0.0
    %809 = vmatpush.msra.mxu0 0.0
    %810 = vmatpush.msra.mxu0 0.0
    %811 = vmatpush.msra.mxu0 0.0
    %812 = vmatpush.msra.mxu0 0.0
    %813 = vmatpush.msra.mxu0 0.0
    %814 = vmatpush.msra.mxu0 0.0
    %815 = vmatpush.msra.mxu0 0.0
    %816 = vmatpush.msra.mxu0 0.0
    %817 = vmatpush.msra.mxu0 0.0
    %818 = vmatpush.msra.mxu0 0.0
    %819 = vmatpush.msra.mxu0 %v685
    %820 = vmatmul.f32.gmra.mxu0 %v793
    %v821 = vpop.f32.mrf.mxu0
    %v822 = vadd.f32 0.0, %v821
    %823 = vmatmul.f32.gmra.mxu0 %v796
    %v824 = vpop.f32.mrf.mxu0
    %v825 = vadd.f32 0.0, %v824
    %826 = vmatmul.f32.gmra.mxu0 %v799
    %v827 = vpop.f32.mrf.mxu0
    %v828 = vadd.f32 0.0, %v827
    %829 = vmatmul.f32.gmra.mxu0 %v802
    %v830 = vpop.f32.mrf.mxu0
    %v831 = vadd.f32 0.0, %v830
    %832 = vdwg.mxu0
    %v833 = vmul.f32 %v781, %v308
    %v834 = vmul.f32 %v784, %v309
    %v835 = vmul.f32 %v787, %v310
    %v836 = vmul.f32 %v790, %v311
    %v837 = vmul.f32 %v822, %v308
    %v838 = vmul.f32 %v825, %v309
    %v839 = vmul.f32 %v828, %v310
    %v840 = vmul.f32 %v831, %v311
    %v842 = vsel %vm140, %v192, 0
    %844 = vmatpush.msra.mxu0 0.0
    %845 = vmatpush.msra.mxu0 0.0
    %846 = vmatpush.msra.mxu0 0.0
    %847 = vmatpush.msra.mxu0 0.0
    %848 = vmatpush.msra.mxu0 0.0
    %849 = vmatpush.msra.mxu0 0.0
    %850 = vmatpush.msra.mxu0 0.0
    %851 = vmatpush.msra.mxu0 0.0
    %852 = vmatpush.msra.mxu0 0.0
    %853 = vmatpush.msra.mxu0 0.0
    %854 = vmatpush.msra.mxu0 0.0
    %855 = vmatpush.msra.mxu0 0.0
    %856 = vmatpush.msra.mxu0 %v836
    %857 = vmatpush.msra.mxu0 %v835
    %858 = vmatpush.msra.mxu0 %v834
    %859 = vmatpush.msra.mxu0 %v833
    %860 = vmatmul.f32.gmra.mxu0 %v842
    %v861 = vpop.f32.mrf.mxu0
    %v862 = vadd.f32 0.0, %v861
    %863 = vdwg.mxu0
    %v865 = vsel %vm140, %v207, 0
    %867 = vmatpush.msra.mxu0 0.0
    %868 = vmatpush.msra.mxu0 0.0
    %869 = vmatpush.msra.mxu0 0.0
    %870 = vmatpush.msra.mxu0 0.0
    %871 = vmatpush.msra.mxu0 0.0
    %872 = vmatpush.msra.mxu0 0.0
    %873 = vmatpush.msra.mxu0 0.0
    %874 = vmatpush.msra.mxu0 0.0
    %875 = vmatpush.msra.mxu0 0.0
    %876 = vmatpush.msra.mxu0 0.0
    %877 = vmatpush.msra.mxu0 0.0
    %878 = vmatpush.msra.mxu0 0.0
    %879 = vmatpush.msra.mxu0 %v840
    %880 = vmatpush.msra.mxu0 %v839
    %881 = vmatpush.msra.mxu0 %v838
    %882 = vmatpush.msra.mxu0 %v837
    %883 = vmatmul.f32.gmra.mxu0 %v865
    %v884 = vpop.f32.mrf.mxu0
    %v885 = vadd.f32 0.0, %v884
    %886 = vdwg.mxu0
    %v887 = vmul.f32 %v862, %v393
    %v888 = vmul.f32 %v885, %v408
    %v889 = vmul.f32 %v887, %v602
    %v890 = vmul.f32 %v888, %v617
    %v891 = vld [vmem:[#allocation10] sm:$0xff]
    %v892 = vld [vmem:[#allocation10 + $0x8] sm:$0xff]
    %v893 = vld [vmem:[#allocation10 + $0x10] sm:$0xff]
    %v894 = vld [vmem:[#allocation10 + $0x18] sm:$0xff]
    %v895 = vld [vmem:[%s8] sm:$0x1]
    %v897 = vperm.slane %v895, 0
    %v900 = vsel %vm140, %v889, 0
    %v903 = vsel %vm140, %v890, 0
    %905 = vmatpush.msra.mxu0 0.0
    %906 = vmatpush.msra.mxu0 0.0
    %907 = vmatpush.msra.mxu0 0.0
    %908 = vmatpush.msra.mxu0 0.0
    %909 = vmatpush.msra.mxu0 0.0
    %910 = vmatpush.msra.mxu0 0.0
    %911 = vmatpush.msra.mxu0 0.0
    %912 = vmatpush.msra.mxu0 0.0
    %913 = vmatpush.msra.mxu0 0.0
    %914 = vmatpush.msra.mxu0 0.0
    %915 = vmatpush.msra.mxu0 0.0
    %916 = vmatpush.msra.mxu0 0.0
    %917 = vmatpush.msra.mxu0 %v894
    %918 = vmatpush.msra.mxu0 %v893
    %919 = vmatpush.msra.mxu0 %v892
    %920 = vmatpush.msra.mxu0 %v891
    %921 = vmatmul.f32.gmra.mxu0 %v900
    %v922 = vpop.f32.mrf.mxu0
    %v923 = vadd.f32 %v897, %v922
    %924 = vmatmul.f32.gmra.mxu0 %v903
    %v925 = vpop.f32.mrf.mxu0
    %v926 = vadd.f32 %v897, %v925
    %927 = vdwg.mxu0
    %928 = vst.msk [vmem:[#allocation13] sm:$0xff] %vm140, %v923
    %929 = vst.msk [vmem:[#allocation13 + $0x8] sm:$0xff] %vm140, %v926
    // Predicated region
    $region66: #{tpu_custom_call.1} parent=1 // pred_check
      _
    $region67: #{tpu_custom_call.1} parent=1 // pred_check_branch
      %931 = sbr.rel (0) target = $region69
    $region68: #{tpu_custom_call.1} parent=1 // pred_region
      %933 = vsyncadd [#allocation4], 0
      %s934 = sshll.u32 [#allocation13], 4
      %s935 = int_to_ptr.vmem [resolvable:$true] %s934
      %s936 = sshll.u32 %s10, 4
      %s937 = int_to_ptr.hbm [resolvable:$true] %s936
      %942 = dma.vmem_to_hbm [thread:$0]  %s935, 256, %s937, [#allocation4], 128, 128, 8
    $region69: #{tpu_custom_call.1} parent=1 // pred_fallthru
      _
    // Predicated region
    $region70: #{tpu_custom_call.1} parent=1 // pred_check
      _
    $region71: #{tpu_custom_call.1} parent=1 // pred_check_branch
      %944 = sbr.rel (0) target = $region73
    $region72: #{tpu_custom_call.1} parent=1 // pred_region
      %946 = dma.done [#allocation4], 256
    $region73: #{tpu_custom_call.1} parent=1 // pred_fallthru
      _
    %947 = vsyncpa [#allocation3], 1
    %948 = vsyncpa [#allocation6], 1
    %949 = vsyncpa [#allocation9], 1
    %950 = vsyncpa [#allocation12], 1
    %951 = vsyncpa [#allocation4], 1

</llo_original>
